<compile_context>
chip_gen: v5e
topology: v5e:2x2
jax: 0.10.0
libtpu: 0.0.40
codegen_flags: <defaults>
</compile_context>

<pallas_src>
import functools

import jax
import jax.numpy as jnp
from jax.experimental import pallas as pl
from jax.experimental.pallas import tpu as pltpu


def _action_num(board_width, board_height):
    return (board_width - 1) * board_height + board_width * (board_height - 1)


def _match3_kernel(x_ref, wc_ref, bc_ref, wf_ref, bf_ref,
                   wv1a_ref, wv1b_ref, bv1_ref, wv2_ref, bv2_ref,
                   out_ref, *, action_dim):
    # x_ref block: (TB, C, HW)   -- NCHW layout, spatial flattened.
    tb = x_ref.shape[0]
    wc = wc_ref[...]                      # (8, C)   rows: [actor, val_ch0, val_ch1, 0...]
    bc = bc_ref[...]                      # (8, 1)

    a_rows, v0_rows, v1_rows = [], [], []
    for b in range(tb):                   # static unroll; each iter is a clean 2-D matmul
        xb = x_ref[b]                                                  # (C, HW)
        cb = jnp.dot(wc, xb, preferred_element_type=jnp.float32) + bc  # (8, HW)
        cb = jnp.maximum(cb, 0.0)                                      # fused relu(conv1x1)
        a_rows.append(cb[0:1, :])
        v0_rows.append(cb[1:2, :])
        v1_rows.append(cb[2:3, :])

    a_map = jnp.concatenate(a_rows, axis=0)                            # (TB, HW)
    v0 = jnp.concatenate(v0_rows, axis=0)                              # (TB, HW)
    v1 = jnp.concatenate(v1_rows, axis=0)                              # (TB, HW)

    # ---------------- actor head ----------------
    logits = jnp.dot(a_map, wf_ref[...],
                     preferred_element_type=jnp.float32) + bf_ref[...]  # (TB, A_pad)
    m = jnp.max(logits, axis=-1, keepdims=True)
    z = logits - m
    lse = jnp.log(jnp.sum(jnp.exp(z), axis=-1, keepdims=True))
    logp = z - lse                                                      # (TB, A_pad)

    # ---------------- critic head ----------------
    # PyTorch's channel-major .view(-1, 2*HW) is realized by splitting w_v1 rows.
    h1 = (jnp.dot(v0, wv1a_ref[...], preferred_element_type=jnp.float32)
          + jnp.dot(v1, wv1b_ref[...], preferred_element_type=jnp.float32)
          + bv1_ref[...])                                               # (TB, 64)
    h1 = jnp.maximum(h1, 0.0)
    val = jnp.tanh(jnp.dot(h1, wv2_ref[...],
                           preferred_element_type=jnp.float32) + bv2_ref[...])  # (TB, 1)

    # Fold the value into padded column `action_dim` of the lane-dense output row.
    lane = jax.lax.broadcasted_iota(jnp.int32, logp.shape, 1)
    out_ref[...] = jnp.where(lane == action_dim, val, logp)


def _prepare_params(pt_params, HW, A, A_pad):
    """PyTorch-layout params -> fused / transposed / padded kernel params."""
    (w_ac, b_ac, w_fc1, b_fc1, w_vc, b_vc, w_v1, b_v1, w_v2, b_v2) = pt_params
    C = w_ac.shape[1]

    # Fused 1x1 conv weight: row 0 = actor conv, rows 1-2 = critic conv, rest zero.
    wc = jnp.zeros((8, C), jnp.float32)
    wc = wc.at[0].set(w_ac.reshape(1, C)[0])
    wc = wc.at[1:3].set(w_vc.reshape(2, C))
    bc = jnp.zeros((8, 1), jnp.float32)
    bc = bc.at[0, 0].set(b_ac[0])
    bc = bc.at[1, 0].set(b_vc[0])
    bc = bc.at[2, 0].set(b_vc[1])

    # Actor FC: (A, HW) -> (HW, A_pad); padded logits get bias -1e30 so exp()==0.
    wf = jnp.zeros((HW, A_pad), jnp.float32).at[:, :A].set(w_fc1.T)
    bf = jnp.full((1, A_pad), -1e30, jnp.float32).at[0, :A].set(b_fc1)

    # Critic FC1: (64, 2*HW) -> (2*HW, 64), split into the two channel halves.
    wv1t = w_v1.T
    wv1a = wv1t[:HW]                    # (HW, 64)
    wv1b = wv1t[HW:]                    # (HW, 64)
    bv1 = b_v1.reshape(1, 64)
    wv2 = w_v2.T                        # (64, 1)
    bv2 = b_v2.reshape(1, 1)
    return (wc, bc, wf, bf, wv1a, wv1b, bv1, wv2, bv2)


@functools.partial(jax.jit, static_argnames=("board_width", "board_height"))
def match3_forward(state_nchw, pt_params, *, board_width, board_height):
    """state_nchw: (B, 128, H, W) float32 (PyTorch NCHW convention)."""
    B, C, H, W = state_nchw.shape
    assert C == 128 and H == board_height and W == board_width
    HW = H * W
    A = _action_num(board_width, board_height)
    A_pad = ((A + 1 + 127) // 128) * 128        # room for A logits + 1 value column

    # Free reshape (no transpose, no HBM round trip).
    x = state_nchw.reshape(B, C, HW)

    TB = min(16, B)
    Bp = ((B + TB - 1) // TB) * TB
    if Bp != B:
        x = jnp.pad(x, ((0, Bp - B), (0, 0), (0, 0)))

    kparams = _prepare_params(pt_params, HW, A, A_pad)

    def resident(shape):
        zeros = (0,) * len(shape)
        return pl.BlockSpec(shape, lambda i: zeros)

    grid_spec = pltpu.PrefetchScalarGridSpec(
        num_scalar_prefetch=0,
        grid=(Bp // TB,),
        in_specs=[
            pl.BlockSpec((TB, C, HW), lambda i: (i, 0, 0)),   # x (NCHW, spatial flat)
            resident((8, C)),                                 # fused conv weight
            resident((8, 1)),                                 # fused conv bias
            resident((HW, A_pad)),                            # act_fc1 weight^T (padded)
            resident((1, A_pad)),                             # act_fc1 bias (padded -1e30)
            resident((HW, 64)),                               # val_fc1 weight^T, rows 0:HW
            resident((HW, 64)),                               # val_fc1 weight^T, rows HW:2HW
            resident((1, 64)),                                # val_fc1 bias
            resident((64, 1)),                                # val_fc2 weight^T
            resident((1, 1)),                                 # val_fc2 bias
        ],
        out_specs=pl.BlockSpec((TB, A_pad), lambda i: (i, 0)),
    )

    out = pl.pallas_call(
        functools.partial(_match3_kernel, action_dim=A),
        out_shape=jax.ShapeDtypeStruct((Bp, A_pad), jnp.float32),
        grid_spec=grid_spec,
        compiler_params=pltpu.CompilerParams(
            dimension_semantics=("parallel",)),
    )(x, *kparams)

    log_probs = out[:B, :A]
    value = out[:B, A:A + 1]
    return log_probs, value


def init_pt_params(key, board_width, board_height):
    """Deterministic synthetic parameters in PyTorch layouts/shapes."""
    H, W = board_height, board_width
    HW = H * W
    A = _action_num(board_width, board_height)
    ks = jax.random.split(key, 10)
    f = lambda k, shape: (0.1 * jax.random.normal(k, shape)).astype(jnp.float32)
    return (
        f(ks[0], (1, 128, 1, 1)), f(ks[1], (1,)),        # act_conv1 weight / bias
        f(ks[2], (A, HW)), f(ks[3], (A,)),               # act_fc1
        f(ks[4], (2, 128, 1, 1)), f(ks[5], (2,)),        # val_conv1
        f(ks[6], (64, 2 * HW)), f(ks[7], (64,)),         # val_fc1
        f(ks[8], (1, 64)), f(ks[9], (1,)),               # val_fc2
    )


def reference_forward(state_nchw, pt_params):
    """Plain-JAX reference mirroring the PyTorch forward exactly."""
    (w_ac, b_ac, w_fc1, b_fc1, w_vc, b_vc, w_v1, b_v1, w_v2, b_v2) = pt_params
    B, C, H, W = state_nchw.shape
    HW = H * W

    # actor
    xa = jnp.einsum('bchw,oc->bohw', state_nchw, w_ac.reshape(1, C)) \
        + b_ac.reshape(1, 1, 1, 1)
    xa = jnp.maximum(xa, 0.0).reshape(B, HW)
    logits = xa @ w_fc1.T + b_fc1
    log_probs = jax.nn.log_softmax(logits, axis=1)

    # critic (channel-major flatten, like .view on NCHW)
    xv = jnp.einsum('bchw,oc->bohw', state_nchw, w_vc.reshape(2, C)) \
        + b_vc.reshape(1, 2, 1, 1)
    xv = jnp.maximum(xv, 0.0).reshape(B, 2 * HW)
    h1 = jnp.maximum(xv @ w_v1.T + b_v1, 0.0)
    val = jnp.tanh(h1 @ w_v2.T + b_v2)
    return log_probs, val


if __name__ == "__main__":
    board_width, board_height = 8, 8
    B, C = 2, 128

    key = jax.random.PRNGKey(0)
    k_x, k_p = jax.random.split(key)
    state = jax.random.normal(k_x, (B, C, board_height, board_width),
                              dtype=jnp.float32)
    params = init_pt_params(k_p, board_width, board_height)

    act, val = match3_forward(state, params,
                              board_width=board_width,
                              board_height=board_height)
    jax.block_until_ready((act, val))

    act_ref, val_ref = reference_forward(state, params)
    assert act.shape == act_ref.shape and val.shape == val_ref.shape
    assert bool(jnp.all(jnp.isfinite(act))) and bool(jnp.all(jnp.isfinite(val)))
    assert jnp.allclose(act, act_ref, atol=1e-4, rtol=1e-4)
    assert jnp.allclose(val, val_ref, atol=1e-4, rtol=1e-4)

    print("KERNEL_OK")
</pallas_src>

<mosaic_0001>
module attributes {stable_mosaic.version = 11 : i64} {
  func.func @_match3_kernel(%arg0: i32, %arg1: memref<2x128x64xf32, #tpu.memory_space<vmem>>, %arg2: memref<8x128xf32, #tpu.memory_space<vmem>>, %arg3: memref<8x1xf32, #tpu.memory_space<vmem>>, %arg4: memref<64x128xf32, #tpu.memory_space<vmem>>, %arg5: memref<1x128xf32, #tpu.memory_space<vmem>>, %arg6: memref<64x64xf32, #tpu.memory_space<vmem>>, %arg7: memref<64x64xf32, #tpu.memory_space<vmem>>, %arg8: memref<1x64xf32, #tpu.memory_space<vmem>>, %arg9: memref<64x1xf32, #tpu.memory_space<vmem>>, %arg10: memref<1x1xf32, #tpu.memory_space<vmem>>, %arg11: memref<2x128xf32, #tpu.memory_space<vmem>>) attributes {dimension_semantics = [#tpu.dimension_semantics<parallel>], iteration_bounds = array<i64: 1>, scalar_prefetch = 0 : i64, scratch_operands = 0 : i64, tpu.core_type = #tpu.core_type<tc>, window_params = [{transform_indices = @transform_0, window_bounds = array<i64: 2, 128, 64>}, {pipeline_mode = #tpu.pipeline_mode<synchronous>, transform_indices = @transform_1, window_bounds = array<i64: 8, 128>}, {pipeline_mode = #tpu.pipeline_mode<synchronous>, transform_indices = @transform_2, window_bounds = array<i64: 8, 1>}, {pipeline_mode = #tpu.pipeline_mode<synchronous>, transform_indices = @transform_3, window_bounds = array<i64: 64, 128>}, {pipeline_mode = #tpu.pipeline_mode<synchronous>, transform_indices = @transform_4, window_bounds = array<i64: 1, 128>}, {pipeline_mode = #tpu.pipeline_mode<synchronous>, transform_indices = @transform_5, window_bounds = array<i64: 64, 64>}, {pipeline_mode = #tpu.pipeline_mode<synchronous>, transform_indices = @transform_6, window_bounds = array<i64: 64, 64>}, {pipeline_mode = #tpu.pipeline_mode<synchronous>, transform_indices = @transform_7, window_bounds = array<i64: 1, 64>}, {pipeline_mode = #tpu.pipeline_mode<synchronous>, transform_indices = @transform_8, window_bounds = array<i64: 64, 1>}, {pipeline_mode = #tpu.pipeline_mode<synchronous>, transform_indices = @transform_9, window_bounds = array<i64: 1, 1>}, {transform_indices = @transform_10, window_bounds = array<i64: 2, 128>}]} {
    %c0 = arith.constant 0 : index
    %c0_0 = arith.constant 0 : index
    %0 = vector.load %arg2[%c0, %c0_0] : memref<8x128xf32, #tpu.memory_space<vmem>>, vector<8x128xf32>
    %c0_1 = arith.constant 0 : index
    %c0_2 = arith.constant 0 : index
    %1 = vector.load %arg3[%c0_1, %c0_2] : memref<8x1xf32, #tpu.memory_space<vmem>>, vector<8x1xf32>
    %c0_3 = arith.constant 0 : index
    %c0_4 = arith.constant 0 : index
    %c0_5 = arith.constant 0 : index
    %2 = vector.load %arg1[%c0_3, %c0_4, %c0_5] : memref<2x128x64xf32, #tpu.memory_space<vmem>>, vector<1x128x64xf32>
    %3 = vector.shape_cast %2 : vector<1x128x64xf32> to vector<128x64xf32>
    %cst = arith.constant dense<0.000000e+00> : vector<8x64xf32>
    %4 = tpu.matmul %0, %3, %cst {dimension_numbers = #tpu.dot_dimension_numbers<[1], [0], [0], [1], [0, 0, 1, 1], [], []>} : vector<8x128xf32>, vector<128x64xf32>, vector<8x64xf32> -> vector<8x64xf32>
    %5 = vector.broadcast %1 : vector<8x1xf32> to vector<8x64xf32>
    %6 = arith.addf %4, %5 : vector<8x64xf32>
    %cst_6 = arith.constant 0.000000e+00 : f32
    %7 = vector.broadcast %cst_6 : f32 to vector<8x64xf32>
    %8 = arith.maximumf %6, %7 : vector<8x64xf32>
    %9 = vector.extract_strided_slice %8 {offsets = [0, 0], sizes = [1, 64], strides = [1, 1]} : vector<8x64xf32> to vector<1x64xf32>
    %10 = vector.extract_strided_slice %8 {offsets = [1, 0], sizes = [1, 64], strides = [1, 1]} : vector<8x64xf32> to vector<1x64xf32>
    %11 = vector.extract_strided_slice %8 {offsets = [2, 0], sizes = [1, 64], strides = [1, 1]} : vector<8x64xf32> to vector<1x64xf32>
    %c1 = arith.constant 1 : index
    %c0_7 = arith.constant 0 : index
    %c0_8 = arith.constant 0 : index
    %12 = vector.load %arg1[%c1, %c0_7, %c0_8] : memref<2x128x64xf32, #tpu.memory_space<vmem>>, vector<1x128x64xf32>
    %13 = vector.shape_cast %12 : vector<1x128x64xf32> to vector<128x64xf32>
    %cst_9 = arith.constant dense<0.000000e+00> : vector<8x64xf32>
    %14 = tpu.matmul %0, %13, %cst_9 {dimension_numbers = #tpu.dot_dimension_numbers<[1], [0], [0], [1], [0, 0, 1, 1], [], []>} : vector<8x128xf32>, vector<128x64xf32>, vector<8x64xf32> -> vector<8x64xf32>
    %15 = vector.broadcast %1 : vector<8x1xf32> to vector<8x64xf32>
    %16 = arith.addf %14, %15 : vector<8x64xf32>
    %cst_10 = arith.constant 0.000000e+00 : f32
    %17 = vector.broadcast %cst_10 : f32 to vector<8x64xf32>
    %18 = arith.maximumf %16, %17 : vector<8x64xf32>
    %19 = vector.extract_strided_slice %18 {offsets = [0, 0], sizes = [1, 64], strides = [1, 1]} : vector<8x64xf32> to vector<1x64xf32>
    %20 = vector.extract_strided_slice %18 {offsets = [1, 0], sizes = [1, 64], strides = [1, 1]} : vector<8x64xf32> to vector<1x64xf32>
    %21 = vector.extract_strided_slice %18 {offsets = [2, 0], sizes = [1, 64], strides = [1, 1]} : vector<8x64xf32> to vector<1x64xf32>
    %22 = tpu.concatenate %9, %19 in 0 : vector<1x64xf32>, vector<1x64xf32> -> vector<2x64xf32>
    %23 = tpu.concatenate %10, %20 in 0 : vector<1x64xf32>, vector<1x64xf32> -> vector<2x64xf32>
    %24 = tpu.concatenate %11, %21 in 0 : vector<1x64xf32>, vector<1x64xf32> -> vector<2x64xf32>
    %c0_11 = arith.constant 0 : index
    %c0_12 = arith.constant 0 : index
    %25 = vector.load %arg4[%c0_11, %c0_12] : memref<64x128xf32, #tpu.memory_space<vmem>>, vector<64x128xf32>
    %cst_13 = arith.constant dense<0.000000e+00> : vector<2x128xf32>
    %26 = tpu.matmul %22, %25, %cst_13 {dimension_numbers = #tpu.dot_dimension_numbers<[1], [0], [0], [1], [0, 0, 1, 1], [], []>} : vector<2x64xf32>, vector<64x128xf32>, vector<2x128xf32> -> vector<2x128xf32>
    %c0_14 = arith.constant 0 : index
    %c0_15 = arith.constant 0 : index
    %27 = vector.load %arg5[%c0_14, %c0_15] : memref<1x128xf32, #tpu.memory_space<vmem>>, vector<1x128xf32>
    %28 = vector.broadcast %27 : vector<1x128xf32> to vector<2x128xf32>
    %29 = arith.addf %26, %28 : vector<2x128xf32>
    %cst_16 = arith.constant dense<0xFF800000> : vector<2xf32>
    %30 = vector.multi_reduction <maximumf>, %29, %cst_16 [1] : vector<2x128xf32> to vector<2xf32>
    %31 = vector.shape_cast %30 : vector<2xf32> to vector<2x1xf32>
    %32 = vector.broadcast %31 : vector<2x1xf32> to vector<2x128xf32>
    %33 = arith.subf %29, %32 : vector<2x128xf32>
    %34 = math.exp %33 : vector<2x128xf32>
    %cst_17 = arith.constant dense<0.000000e+00> : vector<2xf32>
    %35 = vector.multi_reduction <add>, %34, %cst_17 [1] : vector<2x128xf32> to vector<2xf32>
    %36 = vector.shape_cast %35 : vector<2xf32> to vector<2x1xf32>
    %37 = math.log %36 : vector<2x1xf32>
    %38 = vector.broadcast %37 : vector<2x1xf32> to vector<2x128xf32>
    %39 = arith.subf %33, %38 : vector<2x128xf32>
    %c0_18 = arith.constant 0 : index
    %c0_19 = arith.constant 0 : index
    %40 = vector.load %arg6[%c0_18, %c0_19] : memref<64x64xf32, #tpu.memory_space<vmem>>, vector<64x64xf32>
    %cst_20 = arith.constant dense<0.000000e+00> : vector<2x64xf32>
    %41 = tpu.matmul %23, %40, %cst_20 {dimension_numbers = #tpu.dot_dimension_numbers<[1], [0], [0], [1], [0, 0, 1, 1], [], []>} : vector<2x64xf32>, vector<64x64xf32>, vector<2x64xf32> -> vector<2x64xf32>
    %c0_21 = arith.constant 0 : index
    %c0_22 = arith.constant 0 : index
    %42 = vector.load %arg7[%c0_21, %c0_22] : memref<64x64xf32, #tpu.memory_space<vmem>>, vector<64x64xf32>
    %cst_23 = arith.constant dense<0.000000e+00> : vector<2x64xf32>
    %43 = tpu.matmul %24, %42, %cst_23 {dimension_numbers = #tpu.dot_dimension_numbers<[1], [0], [0], [1], [0, 0, 1, 1], [], []>} : vector<2x64xf32>, vector<64x64xf32>, vector<2x64xf32> -> vector<2x64xf32>
    %44 = arith.addf %41, %43 : vector<2x64xf32>
    %c0_24 = arith.constant 0 : index
    %c0_25 = arith.constant 0 : index
    %45 = vector.load %arg8[%c0_24, %c0_25] : memref<1x64xf32, #tpu.memory_space<vmem>>, vector<1x64xf32>
    %46 = vector.broadcast %45 : vector<1x64xf32> to vector<2x64xf32>
    %47 = arith.addf %44, %46 : vector<2x64xf32>
    %cst_26 = arith.constant 0.000000e+00 : f32
    %48 = vector.broadcast %cst_26 : f32 to vector<2x64xf32>
    %49 = arith.maximumf %47, %48 : vector<2x64xf32>
    %c0_27 = arith.constant 0 : index
    %c0_28 = arith.constant 0 : index
    %50 = vector.load %arg9[%c0_27, %c0_28] : memref<64x1xf32, #tpu.memory_space<vmem>>, vector<64x1xf32>
    %cst_29 = arith.constant dense<0.000000e+00> : vector<2x1xf32>
    %51 = tpu.matmul %49, %50, %cst_29 {dimension_numbers = #tpu.dot_dimension_numbers<[1], [0], [0], [1], [0, 0, 1, 1], [], []>} : vector<2x64xf32>, vector<64x1xf32>, vector<2x1xf32> -> vector<2x1xf32>
    %c0_30 = arith.constant 0 : index
    %c0_31 = arith.constant 0 : index
    %52 = vector.load %arg10[%c0_30, %c0_31] : memref<1x1xf32, #tpu.memory_space<vmem>>, vector<1x1xf32>
    %53 = vector.broadcast %52 : vector<1x1xf32> to vector<2x1xf32>
    %54 = arith.addf %51, %53 : vector<2x1xf32>
    %55 = math.tanh %54 : vector<2x1xf32>
    %56 = tpu.iota {dimensions = array<i32: 1>} : vector<2x128xi32>
    %c112_i32 = arith.constant 112 : i32
    %57 = vector.broadcast %c112_i32 : i32 to vector<2x128xi32>
    %58 = arith.cmpi eq, %56, %57 : vector<2x128xi32>
    %59 = vector.shape_cast %55 : vector<2x1xf32> to vector<2x1xf32>
    %60 = vector.broadcast %59 : vector<2x1xf32> to vector<2x128xf32>
    %61 = arith.select %58, %60, %39 : vector<2x128xi1>, vector<2x128xf32>
    %c0_32 = arith.constant 0 : index
    %c0_33 = arith.constant 0 : index
    %62 = vector.load %arg11[%c0_32, %c0_33] : memref<2x128xf32, #tpu.memory_space<vmem>>, vector<2x128xf32>
    tpu.vector_store %arg11[%c0_32, %c0_33], %61 {strides = array<i32>} : memref<2x128xf32, #tpu.memory_space<vmem>>, vector<2x128xf32>,
    return
  }
  func.func @transform_0(%arg0: i32) -> (i32, i32, i32) {
    %c0_i32 = arith.constant 0 : i32
    %c0_i32_0 = arith.constant 0 : i32
    %c0_i32_1 = arith.constant 0 : i32
    return %arg0, %c0_i32, %c0_i32_0 : i32, i32, i32
  }
  func.func @transform_1(%arg0: i32) -> (i32, i32) {
    %c0_i32 = arith.constant 0 : i32
    %c0_i32_0 = arith.constant 0 : i32
    %c0_i32_1 = arith.constant 0 : i32
    return %c0_i32, %c0_i32_0 : i32, i32
  }
  func.func @transform_2(%arg0: i32) -> (i32, i32) {
    %c0_i32 = arith.constant 0 : i32
    %c0_i32_0 = arith.constant 0 : i32
    %c0_i32_1 = arith.constant 0 : i32
    return %c0_i32, %c0_i32_0 : i32, i32
  }
  func.func @transform_3(%arg0: i32) -> (i32, i32) {
    %c0_i32 = arith.constant 0 : i32
    %c0_i32_0 = arith.constant 0 : i32
    %c0_i32_1 = arith.constant 0 : i32
    return %c0_i32, %c0_i32_0 : i32, i32
  }
  func.func @transform_4(%arg0: i32) -> (i32, i32) {
    %c0_i32 = arith.constant 0 : i32
    %c0_i32_0 = arith.constant 0 : i32
    %c0_i32_1 = arith.constant 0 : i32
    return %c0_i32, %c0_i32_0 : i32, i32
  }
  func.func @transform_5(%arg0: i32) -> (i32, i32) {
    %c0_i32 = arith.constant 0 : i32
    %c0_i32_0 = arith.constant 0 : i32
    %c0_i32_1 = arith.constant 0 : i32
    return %c0_i32, %c0_i32_0 : i32, i32
  }
  func.func @transform_6(%arg0: i32) -> (i32, i32) {
    %c0_i32 = arith.constant 0 : i32
    %c0_i32_0 = arith.constant 0 : i32
    %c0_i32_1 = arith.constant 0 : i32
    return %c0_i32, %c0_i32_0 : i32, i32
  }
  func.func @transform_7(%arg0: i32) -> (i32, i32) {
    %c0_i32 = arith.constant 0 : i32
    %c0_i32_0 = arith.constant 0 : i32
    %c0_i32_1 = arith.constant 0 : i32
    return %c0_i32, %c0_i32_0 : i32, i32
  }
  func.func @transform_8(%arg0: i32) -> (i32, i32) {
    %c0_i32 = arith.constant 0 : i32
    %c0_i32_0 = arith.constant 0 : i32
    %c0_i32_1 = arith.constant 0 : i32
    return %c0_i32, %c0_i32_0 : i32, i32
  }
  func.func @transform_9(%arg0: i32) -> (i32, i32) {
    %c0_i32 = arith.constant 0 : i32
    %c0_i32_0 = arith.constant 0 : i32
    %c0_i32_1 = arith.constant 0 : i32
    return %c0_i32, %c0_i32_0 : i32, i32
  }
  func.func @transform_10(%arg0: i32) -> (i32, i32) {
    %c0_i32 = arith.constant 0 : i32
    %c0_i32_0 = arith.constant 0 : i32
    return %arg0, %c0_i32 : i32, i32
  }
}

</mosaic_0001>

<llo_original>
// kernel: match3_forward.1
$region0: #{match3_forward.1}
  #allocation0 [shape = 'u32[]', space=smem, size = 0x4, offset = 0x4, fixed_abs, tag = 'smem constant byte address 0x4 - core index']
  #allocation1 [shape = 'u32[72,128]{1,0:T(1,128)}', space=vmem, size = 0x9000, scoped, tag = 'internal scratch']
  #allocation2 [shape = 'f32[1,1]{1,0:T(1,128)S(1)}', space=vmem, size = 0x200, scoped, tag = 'scoped memory for match3_forward.1']
  %s0 = inlined_call_operand.vmem [shape: f32[2,128,64], index: 0, kind: input, shape index: {}]
  %s1 = inlined_call_operand.vmem [shape: f32[8,128], index: 1, kind: input, shape index: {}]
  %s2 = inlined_call_operand.vmem [shape: f32[8,1], index: 2, kind: input, shape index: {}]
  %s3 = inlined_call_operand.vmem [shape: f32[64,128], index: 3, kind: input, shape index: {}]
  %s4 = inlined_call_operand.vmem [shape: f32[1,128], index: 4, kind: input, shape index: {}]
  %s5 = inlined_call_operand.vmem [shape: f32[64,64], index: 5, kind: input, shape index: {}]
  %s6 = inlined_call_operand.vmem [shape: f32[64,64], index: 6, kind: input, shape index: {}]
  %s7 = inlined_call_operand.vmem [shape: f32[1,64], index: 7, kind: input, shape index: {}]
  %s8 = inlined_call_operand.vmem [shape: f32[64,1], index: 8, kind: input, shape index: {}]
  %s9 = inlined_call_operand.<no memory space> [shape: f32[1,1], index: 9, kind: input, shape index: {}]
  %s10 = inlined_call_operand.vmem [shape: f32[2,128], index: 10, kind: output, shape index: {}]
  %s11 = sld [smem:[#allocation0]]
  $region50: #{match3_forward.1} parent=0
    _
  %s13 = ssub.s32 1, %s11
  %s14 = scalar_select 0, %s13, %s11
  %v15 = vstv %s9
  %16 = vst [vmem:[#allocation2] sm:$0x1] %v15
  // Predicated region
  $region2: #{match3_forward.1} parent=0 // pred_check
    _
  $region3: #{match3_forward.1} parent=0 // pred_check_branch
    %18 = sbr.rel (0) target = $region5
  $region4: #{match3_forward.1} parent=0 // pred_region
    _
  $region5: #{match3_forward.1} parent=0 // pred_fallthru
    _
  // Predicated region
  $region6: #{match3_forward.1} parent=0 // pred_check
    _
  $region7: #{match3_forward.1} parent=0 // pred_check_branch
    %20 = sbr.rel (0) target = $region9
  $region8: #{match3_forward.1} parent=0 // pred_region
    _
  $region9: #{match3_forward.1} parent=0 // pred_fallthru
    _
  // Predicated region
  $region10: #{match3_forward.1} parent=0 // pred_check
    _
  $region11: #{match3_forward.1} parent=0 // pred_check_branch
    %22 = sbr.rel (0) target = $region13
  $region12: #{match3_forward.1} parent=0 // pred_region
    _
  $region13: #{match3_forward.1} parent=0 // pred_fallthru
    _
  // Predicated region
  $region14: #{match3_forward.1} parent=0 // pred_check
    _
  $region15: #{match3_forward.1} parent=0 // pred_check_branch
    %24 = sbr.rel (0) target = $region17
  $region16: #{match3_forward.1} parent=0 // pred_region
    _
  $region17: #{match3_forward.1} parent=0 // pred_fallthru
    _
  // Predicated region
  $region18: #{match3_forward.1} parent=0 // pred_check
    _
  $region19: #{match3_forward.1} parent=0 // pred_check_branch
    %26 = sbr.rel (0) target = $region21
  $region20: #{match3_forward.1} parent=0 // pred_region
    _
  $region21: #{match3_forward.1} parent=0 // pred_fallthru
    _
  // Predicated region
  $region22: #{match3_forward.1} parent=0 // pred_check
    _
  $region23: #{match3_forward.1} parent=0 // pred_check_branch
    %28 = sbr.rel (0) target = $region25
  $region24: #{match3_forward.1} parent=0 // pred_region
    _
  $region25: #{match3_forward.1} parent=0 // pred_fallthru
    _
  // Predicated region
  $region26: #{match3_forward.1} parent=0 // pred_check
    _
  $region27: #{match3_forward.1} parent=0 // pred_check_branch
    %30 = sbr.rel (0) target = $region29
  $region28: #{match3_forward.1} parent=0 // pred_region
    _
  $region29: #{match3_forward.1} parent=0 // pred_fallthru
    _
  // Predicated region
  $region30: #{match3_forward.1} parent=0 // pred_check
    _
  $region31: #{match3_forward.1} parent=0 // pred_check_branch
    %32 = sbr.rel (0) target = $region33
  $region32: #{match3_forward.1} parent=0 // pred_region
    _
  $region33: #{match3_forward.1} parent=0 // pred_fallthru
    _
  // Predicated region
  $region34: #{match3_forward.1} parent=0 // pred_check
    _
  $region35: #{match3_forward.1} parent=0 // pred_check_branch
    %34 = sbr.rel (0) target = $region37
  $region36: #{match3_forward.1} parent=0 // pred_region
    _
  $region37: #{match3_forward.1} parent=0 // pred_fallthru
    _
  // Predicated region
  $region38: #{match3_forward.1} parent=0 // pred_check
    _
  $region39: #{match3_forward.1} parent=0 // pred_check_branch
    %36 = sbr.rel (0) target = $region41
  $region40: #{match3_forward.1} parent=0 // pred_region
    _
  $region41: #{match3_forward.1} parent=0 // pred_fallthru
    _
  %v37 = vld [vmem:[%s1] sm:$0xff]
  %v38 = vld [vmem:[%s2] sm:$0xff]
  %v39 = vld [vmem:[%s0] sm:$0xff]
  %v40 = vld [vmem:[%s0 + $0x8] sm:$0xff]
  %v41 = vld [vmem:[%s0 + $0x10] sm:$0xff]
  %v42 = vld [vmem:[%s0 + $0x18] sm:$0xff]
  %v43 = vld [vmem:[%s0 + $0x20] sm:$0xff]
  %v44 = vld [vmem:[%s0 + $0x28] sm:$0xff]
  %v45 = vld [vmem:[%s0 + $0x30] sm:$0xff]
  %v46 = vld [vmem:[%s0 + $0x38] sm:$0xff]
  %v47 = vld [vmem:[%s0 + $0x40] sm:$0xff]
  %v48 = vld [vmem:[%s0 + $0x48] sm:$0xff]
  %v49 = vld [vmem:[%s0 + $0x50] sm:$0xff]
  %v50 = vld [vmem:[%s0 + $0x58] sm:$0xff]
  %v51 = vld [vmem:[%s0 + $0x60] sm:$0xff]
  %v52 = vld [vmem:[%s0 + $0x68] sm:$0xff]
  %v53 = vld [vmem:[%s0 + $0x70] sm:$0xff]
  %v54 = vld [vmem:[%s0 + $0x78] sm:$0xff]
  %56 = vset.pattern.permute.xlu0 0
  %57 = vperm.xlu0 %56, %v38
  %v58 = vpop.permute.xlu0 %57
  %60 = vmatpush.msra.mxu0 %v54
  %61 = vmatpush.msra.mxu0 %v53
  %62 = vmatpush.msra.mxu0 %v52
  %63 = vmatpush.msra.mxu0 %v51
  %64 = vmatpush.msra.mxu0 %v50
  %65 = vmatpush.msra.mxu0 %v49
  %66 = vmatpush.msra.mxu0 %v48
  %67 = vmatpush.msra.mxu0 %v47
  %68 = vmatpush.msra.mxu0 %v46
  %69 = vmatpush.msra.mxu0 %v45
  %70 = vmatpush.msra.mxu0 %v44
  %71 = vmatpush.msra.mxu0 %v43
  %72 = vmatpush.msra.mxu0 %v42
  %73 = vmatpush.msra.mxu0 %v41
  %74 = vmatpush.msra.mxu0 %v40
  %75 = vmatpush.msra.mxu0 %v39
  %76 = vmatmul.f32.gmra.mxu0 %v37
  %v77 = vpop.f32.mrf.mxu0
  %v78 = vadd.f32 %v58, %v77
  %79 = vdwg.mxu0
  %v80 = vmax.f32 %v78, 0.0
  %s81 = scalar_lea.vmem %s0, 128
  %v82 = vld [vmem:[%s81] sm:$0xff]
  %v83 = vld [vmem:[%s81 + $0x8] sm:$0xff]
  %v84 = vld [vmem:[%s81 + $0x10] sm:$0xff]
  %v85 = vld [vmem:[%s81 + $0x18] sm:$0xff]
  %v86 = vld [vmem:[%s81 + $0x20] sm:$0xff]
  %v87 = vld [vmem:[%s81 + $0x28] sm:$0xff]
  %v88 = vld [vmem:[%s81 + $0x30] sm:$0xff]
  %v89 = vld [vmem:[%s81 + $0x38] sm:$0xff]
  %v90 = vld [vmem:[%s81 + $0x40] sm:$0xff]
  %v91 = vld [vmem:[%s81 + $0x48] sm:$0xff]
  %v92 = vld [vmem:[%s81 + $0x50] sm:$0xff]
  %v93 = vld [vmem:[%s81 + $0x58] sm:$0xff]
  %v94 = vld [vmem:[%s81 + $0x60] sm:$0xff]
  %v95 = vld [vmem:[%s81 + $0x68] sm:$0xff]
  %v96 = vld [vmem:[%s81 + $0x70] sm:$0xff]
  %v97 = vld [vmem:[%s81 + $0x78] sm:$0xff]
  %98 = vmatpush.msra.mxu0 %v97
  %99 = vmatpush.msra.mxu0 %v96
  %100 = vmatpush.msra.mxu0 %v95
  %101 = vmatpush.msra.mxu0 %v94
  %102 = vmatpush.msra.mxu0 %v93
  %103 = vmatpush.msra.mxu0 %v92
  %104 = vmatpush.msra.mxu0 %v91
  %105 = vmatpush.msra.mxu0 %v90
  %106 = vmatpush.msra.mxu0 %v89
  %107 = vmatpush.msra.mxu0 %v88
  %108 = vmatpush.msra.mxu0 %v87
  %109 = vmatpush.msra.mxu0 %v86
  %110 = vmatpush.msra.mxu0 %v85
  %111 = vmatpush.msra.mxu0 %v84
  %112 = vmatpush.msra.mxu0 %v83
  %113 = vmatpush.msra.mxu0 %v82
  %114 = vmatmul.f32.gmra.mxu0 %v37
  %v115 = vpop.f32.mrf.mxu0
  %v116 = vadd.f32 %v58, %v115
  %117 = vdwg.mxu0
  %v118 = vmax.f32 %v116, 0.0
  %v120 = vrot.slane %v118, 7
  %vm122 = vcmask 1040384
  %v123 = vsel %vm122, %v80, %v120
  %v125 = vrot.slane %v80, 1
  %v127 = vsel %vm122, %v125, %v118
  %v128 = vrot.slane %v80, 2
  %v130 = vrot.slane %v118, 1
  %v132 = vsel %vm122, %v128, %v130
  %v133 = vld [vmem:[%s3] sm:$0xff]
  %v134 = vld [vmem:[%s3 + $0x8] sm:$0xff]
  %v135 = vld [vmem:[%s3 + $0x10] sm:$0xff]
  %v136 = vld [vmem:[%s3 + $0x18] sm:$0xff]
  %v137 = vld [vmem:[%s3 + $0x20] sm:$0xff]
  %v138 = vld [vmem:[%s3 + $0x28] sm:$0xff]
  %v139 = vld [vmem:[%s3 + $0x30] sm:$0xff]
  %v140 = vld [vmem:[%s3 + $0x38] sm:$0xff]
  %v141 = vld [vmem:[%s4] sm:$0x1]
  %v143 = vperm.slane %v141, 0
  %vm145 = vcmask 523264
  %v147 = vsel %vm145, %v123, 0
  %149 = vmatpush.msra.mxu0 0.0
  %150 = vmatpush.msra.mxu0 0.0
  %151 = vmatpush.msra.mxu0 0.0
  %152 = vmatpush.msra.mxu0 0.0
  %153 = vmatpush.msra.mxu0 0.0
  %154 = vmatpush.msra.mxu0 0.0
  %155 = vmatpush.msra.mxu0 0.0
  %156 = vmatpush.msra.mxu0 0.0
  %157 = vmatpush.msra.mxu0 %v140
  %158 = vmatpush.msra.mxu0 %v139
  %159 = vmatpush.msra.mxu0 %v138
  %160 = vmatpush.msra.mxu0 %v137
  %161 = vmatpush.msra.mxu0 %v136
  %162 = vmatpush.msra.mxu0 %v135
  %163 = vmatpush.msra.mxu0 %v134
  %164 = vmatpush.msra.mxu0 %v133
  %165 = vmatmul.f32.gmra.mxu0 %v147
  %v166 = vpop.f32.mrf.mxu0
  %v167 = vadd.f32 %v143, %v166
  %168 = vdwg.mxu0
  %vm169 = vcmask 1041408
  %v170 = vsel %vm169, %v167, -inf
  %171 = vmax.xlane.f32.xlu0 %v170
  %v172 = vpop.xlane.xlu0 %171
  %v173 = vsub.f32 %v167, %v172
  %v174 = vmul.f32 %v173, 1.442695
  %v175 = vpow.pop %v174
  %v176 = vsel %vm169, %v175, 0.0
  %177 = vadd.xlane.f32.xlu0 %v176
  %v178 = vpop.xlane.xlu0 %177
  %v179 = vlog2.pop %v178
  %v180 = vmul.f32 %v179, 0.6931472
  %v181 = vsub.f32 %v173, %v180
  %v182 = vld [vmem:[%s5] sm:$0xff]
  %v183 = vld [vmem:[%s5 + $0x8] sm:$0xff]
  %v184 = vld [vmem:[%s5 + $0x10] sm:$0xff]
  %v185 = vld [vmem:[%s5 + $0x18] sm:$0xff]
  %v186 = vld [vmem:[%s5 + $0x20] sm:$0xff]
  %v187 = vld [vmem:[%s5 + $0x28] sm:$0xff]
  %v188 = vld [vmem:[%s5 + $0x30] sm:$0xff]
  %v189 = vld [vmem:[%s5 + $0x38] sm:$0xff]
  %v190 = vld [vmem:[%s6] sm:$0xff]
  %v191 = vld [vmem:[%s6 + $0x8] sm:$0xff]
  %v192 = vld [vmem:[%s6 + $0x10] sm:$0xff]
  %v193 = vld [vmem:[%s6 + $0x18] sm:$0xff]
  %v194 = vld [vmem:[%s6 + $0x20] sm:$0xff]
  %v195 = vld [vmem:[%s6 + $0x28] sm:$0xff]
  %v196 = vld [vmem:[%s6 + $0x30] sm:$0xff]
  %v197 = vld [vmem:[%s6 + $0x38] sm:$0xff]
  %v199 = vsel %vm145, %v132, 0
  %201 = vmatpush.msra.mxu0 0.0
  %202 = vmatpush.msra.mxu0 0.0
  %203 = vmatpush.msra.mxu0 0.0
  %204 = vmatpush.msra.mxu0 0.0
  %205 = vmatpush.msra.mxu0 0.0
  %206 = vmatpush.msra.mxu0 0.0
  %207 = vmatpush.msra.mxu0 0.0
  %208 = vmatpush.msra.mxu0 0.0
  %209 = vmatpush.msra.mxu0 %v197
  %210 = vmatpush.msra.mxu0 %v196
  %211 = vmatpush.msra.mxu0 %v195
  %212 = vmatpush.msra.mxu0 %v194
  %213 = vmatpush.msra.mxu0 %v193
  %214 = vmatpush.msra.mxu0 %v192
  %215 = vmatpush.msra.mxu0 %v191
  %216 = vmatpush.msra.mxu0 %v190
  %217 = vmatmul.f32.gmra.mxu0 %v199
  %v218 = vpop.f32.mrf.mxu0
  %v219 = vadd.f32 0.0, %v218
  %220 = vdwg.mxu0
  %v222 = vsel %vm145, %v127, 0
  %224 = vmatpush.msra.mxu0 0.0
  %225 = vmatpush.msra.mxu0 0.0
  %226 = vmatpush.msra.mxu0 0.0
  %227 = vmatpush.msra.mxu0 0.0
  %228 = vmatpush.msra.mxu0 0.0
  %229 = vmatpush.msra.mxu0 0.0
  %230 = vmatpush.msra.mxu0 0.0
  %231 = vmatpush.msra.mxu0 0.0
  %232 = vmatpush.msra.mxu0 %v189
  %233 = vmatpush.msra.mxu0 %v188
  %234 = vmatpush.msra.mxu0 %v187
  %235 = vmatpush.msra.mxu0 %v186
  %236 = vmatpush.msra.mxu0 %v185
  %237 = vmatpush.msra.mxu0 %v184
  %238 = vmatpush.msra.mxu0 %v183
  %239 = vmatpush.msra.mxu0 %v182
  %240 = vmatmul.f32.gmra.mxu0 %v222
  %v241 = vpop.f32.mrf.mxu0
  %v242 = vadd.f32 %v219, %v241
  %243 = vdwg.mxu0
  %v244 = vld [vmem:[%s7] sm:$0x1]
  %v246 = vperm.slane %v244, 0
  %v248 = vadd.f32 %v242, %v246
  %v249 = vmax.f32 %v248, 0.0
  %v250 = vld [vmem:[%s8] sm:$0xff]
  %v251 = vld [vmem:[%s8 + $0x8] sm:$0xff]
  %v252 = vld [vmem:[%s8 + $0x10] sm:$0xff]
  %v253 = vld [vmem:[%s8 + $0x18] sm:$0xff]
  %v254 = vld [vmem:[%s8 + $0x20] sm:$0xff]
  %v255 = vld [vmem:[%s8 + $0x28] sm:$0xff]
  %v256 = vld [vmem:[%s8 + $0x30] sm:$0xff]
  %v257 = vld [vmem:[%s8 + $0x38] sm:$0xff]
  %v258 = vld [vmem:[#allocation2] sm:$0x1]
  %v260 = vperm.slane %v258, 0
  %v263 = vsel %vm145, %v249, 0
  %265 = vmatpush.msra.mxu0 0.0
  %266 = vmatpush.msra.mxu0 0.0
  %267 = vmatpush.msra.mxu0 0.0
  %268 = vmatpush.msra.mxu0 0.0
  %269 = vmatpush.msra.mxu0 0.0
  %270 = vmatpush.msra.mxu0 0.0
  %271 = vmatpush.msra.mxu0 0.0
  %272 = vmatpush.msra.mxu0 0.0
  %273 = vmatpush.msra.mxu0 %v257
  %274 = vmatpush.msra.mxu0 %v256
  %275 = vmatpush.msra.mxu0 %v255
  %276 = vmatpush.msra.mxu0 %v254
  %277 = vmatpush.msra.mxu0 %v253
  %278 = vmatpush.msra.mxu0 %v252
  %279 = vmatpush.msra.mxu0 %v251
  %280 = vmatpush.msra.mxu0 %v250
  %281 = vmatmul.f32.gmra.mxu0 %v263
  %v282 = vpop.f32.mrf.mxu0
  %v283 = vadd.f32 %v260, %v282
  %284 = vdwg.mxu0
  %v285 = vtanh.pop %v283
  %v286 = vlaneseq
  %v287 = vand.u32 %v286, 127
  %vm288 = vcmp.eq.s32.totalorder %v287, 112
  %290 = vset.pattern.permute.xlu0 0
  %291 = vperm.xlu0 %290, %v285
  %v292 = vpop.permute.xlu0 %291
  %v294 = vsel %vm288, %v292, %v181
  %295 = vst [vmem:[%s10] sm:$0x3] %v294
  // Predicated region
  $region42: #{match3_forward.1} parent=0 // pred_check
    _
  $region43: #{match3_forward.1} parent=0 // pred_check_branch
    %297 = sbr.rel (0) target = $region45
  $region44: #{match3_forward.1} parent=0 // pred_region
    _
  $region45: #{match3_forward.1} parent=0 // pred_fallthru
    _
  // Predicated region
  $region46: #{match3_forward.1} parent=0 // pred_check
    _
  $region47: #{match3_forward.1} parent=0 // pred_check_branch
    %299 = sbr.rel (0) target = $region49
  $region48: #{match3_forward.1} parent=0 // pred_region
    _
  $region49: #{match3_forward.1} parent=0 // pred_fallthru
    _

</llo_original>
